<compile_context>
chip_gen: v7x
topology: tpu7x:2x2x1
jax: 0.10.0
libtpu: 0.0.40
codegen_flags: <defaults>
</compile_context>

<pallas_src>
import functools

import jax
import jax.numpy as jnp
from jax.experimental import pallas as pl
from jax.experimental.pallas import tpu as pltpu

_LANES = 128
_SUBLANES = 8        # f32 sublane packing
_EPS = 1e-12


def _multiloss_kernel(n_ref, x_ref, y_ref, o_ref, acc_ref):
    """Accumulate six moments over row blocks; finalize MSE + (1 - Pearson).

    acc_ref rows: 0=sum(x) 1=sum(y) 2=sum(x*y) 3=sum(x*x) 4=sum(y*y)
                  5=sum((x-y)^2)  (rows 6..7 unused, kept for (8,128) tiling)
    Per-step partials are kept as per-lane (128,) vectors; the cross-lane
    reduces run only once in the finalize step.
    """
    i = pl.program_id(0)

    @pl.when(i == 0)
    def _init():
        acc_ref[...] = jnp.zeros_like(acc_ref)

    x = x_ref[...].astype(jnp.float32)
    y = y_ref[...].astype(jnp.float32)
    d = x - y

    acc_ref[0] = acc_ref[0] + jnp.sum(x, axis=0)
    acc_ref[1] = acc_ref[1] + jnp.sum(y, axis=0)
    acc_ref[2] = acc_ref[2] + jnp.sum(x * y, axis=0)
    acc_ref[3] = acc_ref[3] + jnp.sum(x * x, axis=0)
    acc_ref[4] = acc_ref[4] + jnp.sum(y * y, axis=0)
    acc_ref[5] = acc_ref[5] + jnp.sum(d * d, axis=0)

    @pl.when(i == pl.num_programs(0) - 1)
    def _finalize():
        inv_n = 1.0 / n_ref[0].astype(jnp.float32)

        sx = jnp.sum(acc_ref[0])
        sy = jnp.sum(acc_ref[1])
        sxy = jnp.sum(acc_ref[2])
        sxx = jnp.sum(acc_ref[3])
        syy = jnp.sum(acc_ref[4])
        sdd = jnp.sum(acc_ref[5])

        # MSELoss(reduction='none')(x, y).mean() — direct sum of squared diffs.
        mse = sdd * inv_n

        # PearsonCorr loss: 1 - corr(x, y); epsilon placement matches the
        # reference: corr = cov / (sqrt(var_x) * sqrt(var_y) + eps).
        cov = sxy - sx * sy * inv_n
        var_x = jnp.maximum(sxx - sx * sx * inv_n, 0.0)
        var_y = jnp.maximum(syy - sy * sy * inv_n, 0.0)
        denom = jnp.sqrt(var_x) * jnp.sqrt(var_y) + _EPS
        corr = cov / denom

        o_ref[0, 0] = mse + (1.0 - corr)


@functools.partial(jax.jit, static_argnames=("block_rows",))
def multi_loss(data: jax.Array, target: jax.Array, *, block_rows: int = 512):
    """MultiLoss('mse+pearson') forward.  data, target: shape (batch,)."""
    assert data.shape == target.shape and data.ndim == 1
    n = data.shape[0]

    rows = pl.cdiv(n, _LANES)
    rows = pl.cdiv(rows, _SUBLANES) * _SUBLANES      # sublane-dense tiles
    br = min(block_rows, rows)                       # rows per grid step
    rows = pl.cdiv(rows, br) * br                    # whole number of blocks
    padded = rows * _LANES
    num_blocks = rows // br

    def prep(a):
        if padded != n:                              # zeros are moment-neutral
            a = jnp.pad(a, (0, padded - n))
        return a.reshape(rows, _LANES)               # layout-preserving

    x = prep(data)
    y = prep(target)
    n_smem = jnp.array([n], dtype=jnp.int32)         # SMEM scalar (no retrace)

    out = pl.pallas_call(
        _multiloss_kernel,
        out_shape=jax.ShapeDtypeStruct((1, 1), jnp.float32),
        grid_spec=pltpu.PrefetchScalarGridSpec(
            num_scalar_prefetch=1,
            grid=(num_blocks,),
            in_specs=[
                pl.BlockSpec((br, _LANES), lambda i, n_ref: (i, 0)),
                pl.BlockSpec((br, _LANES), lambda i, n_ref: (i, 0)),
            ],
            out_specs=pl.BlockSpec(memory_space=pltpu.MemorySpace.SMEM),
            scratch_shapes=[pltpu.VMEM((_SUBLANES, _LANES), jnp.float32)],
        ),
        compiler_params=pltpu.CompilerParams(
            dimension_semantics=("arbitrary",)),
    )(n_smem, x, y)
    return out[0, 0]


def _reference_multi_loss(data, target):
    """Pure-JAX reference matching the PyTorch MultiLoss('mse+pearson')."""
    x = data.astype(jnp.float32)
    y = target.astype(jnp.float32)
    mse = jnp.mean((x - y) ** 2)
    vx = x - jnp.mean(x)
    vy = y - jnp.mean(y)
    corr = jnp.sum(vx * vy) / (
        jnp.sqrt(jnp.sum(vx * vx)) * jnp.sqrt(jnp.sum(vy * vy)) + _EPS
    )
    return mse + (1.0 - corr)


if __name__ == "__main__":
    key = jax.random.PRNGKey(0)
    k1, k2 = jax.random.split(key)

    # predicted scores and targets in [0, 1] (phrase-matching regression)
    batch = 128
    data = jax.random.uniform(k1, (batch,), dtype=jnp.float32)
    target = jax.random.uniform(k2, (batch,), dtype=jnp.float32)
    loss = jax.block_until_ready(multi_loss(data, target))
    ref = _reference_multi_loss(data, target)
    assert jnp.isfinite(loss)
    assert jnp.allclose(loss, ref, rtol=1e-4, atol=1e-4), (loss, ref)

    # ragged batch -> exercises the zero-padding path
    batch2 = 100
    d2 = jax.random.uniform(k1, (batch2,), dtype=jnp.float32)
    t2 = jax.random.uniform(k2, (batch2,), dtype=jnp.float32)
    loss2 = jax.block_until_ready(multi_loss(d2, t2))
    ref2 = _reference_multi_loss(d2, t2)
    assert jnp.allclose(loss2, ref2, rtol=1e-4, atol=1e-4), (loss2, ref2)

    # small block_rows -> exercises the multi-block accumulation grid
    batch3 = 2048
    d3 = jax.random.uniform(k1, (batch3,), dtype=jnp.float32)
    t3 = jax.random.uniform(k2, (batch3,), dtype=jnp.float32)
    loss3 = jax.block_until_ready(multi_loss(d3, t3, block_rows=8))
    ref3 = _reference_multi_loss(d3, t3)
    assert jnp.allclose(loss3, ref3, rtol=1e-4, atol=1e-4), (loss3, ref3)

    # degenerate batch (constant target) -> finite, no NaN from rsqrt/variance
    loss4 = jax.block_until_ready(multi_loss(d2, jnp.full((batch2,), 0.5)))
    assert jnp.isfinite(loss4)

    print("KERNEL_OK")
</pallas_src>

<mosaic_0001>
module attributes {stable_mosaic.version = 11 : i64} {
  func.func @_multiloss_kernel(%arg0: i32, %arg1: memref<1xi32, #tpu.memory_space<smem>>, %arg2: memref<8x128xf32, #tpu.memory_space<vmem>>, %arg3: memref<8x128xf32, #tpu.memory_space<vmem>>, %arg4: memref<1x1xf32, #tpu.memory_space<smem>>, %arg5: memref<8x128xf32, #tpu.memory_space<vmem>>) attributes {dimension_semantics = [#tpu.dimension_semantics<arbitrary>], iteration_bounds = array<i64: 1>, scalar_prefetch = 1 : i64, scratch_operands = 1 : i64, tpu.core_type = #tpu.core_type<tc>, window_params = [{transform_indices = @transform_0, window_bounds = array<i64: 8, 128>}, {transform_indices = @transform_1, window_bounds = array<i64: 8, 128>}, {transform_indices = @transform_2, window_bounds = array<i64: 1, 1>}]} {
    %c0_i32 = arith.constant 0 : i32
    %0 = arith.cmpi eq, %arg0, %c0_i32 : i32
    %1 = arith.extui %0 : i1 to i32
    %c0_i32_0 = arith.constant 0 : i32
    %2 = arith.cmpi ne, %1, %c0_i32_0 : i32
    scf.if %2 {
      %cst_30 = arith.constant 0.000000e+00 : f32
      %55 = vector.broadcast %cst_30 : f32 to vector<8x128xf32>
      %c0_31 = arith.constant 0 : index
      %c0_32 = arith.constant 0 : index
      %56 = vector.load %arg5[%c0_31, %c0_32] : memref<8x128xf32, #tpu.memory_space<vmem>>, vector<8x128xf32>
      tpu.vector_store %arg5[%c0_31, %c0_32], %55 {strides = array<i32>} : memref<8x128xf32, #tpu.memory_space<vmem>>, vector<8x128xf32>,
    } else {
    }
    %c0 = arith.constant 0 : index
    %c0_1 = arith.constant 0 : index
    %3 = vector.load %arg2[%c0, %c0_1] : memref<8x128xf32, #tpu.memory_space<vmem>>, vector<8x128xf32>
    %c0_2 = arith.constant 0 : index
    %c0_3 = arith.constant 0 : index
    %4 = vector.load %arg3[%c0_2, %c0_3] : memref<8x128xf32, #tpu.memory_space<vmem>>, vector<8x128xf32>
    %5 = arith.subf %3, %4 : vector<8x128xf32>
    %c0_4 = arith.constant 0 : index
    %c0_5 = arith.constant 0 : index
    %6 = vector.load %arg5[%c0_4, %c0_5] : memref<8x128xf32, #tpu.memory_space<vmem>>, vector<1x128xf32>
    %7 = vector.shape_cast %6 : vector<1x128xf32> to vector<128xf32>
    %cst = arith.constant dense<0.000000e+00> : vector<128xf32>
    %8 = vector.multi_reduction <add>, %3, %cst [0] : vector<8x128xf32> to vector<128xf32>
    %9 = arith.addf %7, %8 : vector<128xf32>
    %c0_6 = arith.constant 0 : index
    %c0_7 = arith.constant 0 : index
    %10 = vector.load %arg5[%c0_6, %c0_7] : memref<8x128xf32, #tpu.memory_space<vmem>>, vector<1x128xf32>
    %11 = vector.shape_cast %10 : vector<1x128xf32> to vector<128xf32>
    %12 = vector.shape_cast %9 : vector<128xf32> to vector<1x128xf32>
    tpu.vector_store %arg5[%c0_6, %c0_7], %12 {strides = array<i32>} : memref<8x128xf32, #tpu.memory_space<vmem>>, vector<1x128xf32>,
    %c1 = arith.constant 1 : index
    %c0_8 = arith.constant 0 : index
    %13 = vector.load %arg5[%c1, %c0_8] : memref<8x128xf32, #tpu.memory_space<vmem>>, vector<1x128xf32>
    %14 = vector.shape_cast %13 : vector<1x128xf32> to vector<128xf32>
    %cst_9 = arith.constant dense<0.000000e+00> : vector<128xf32>
    %15 = vector.multi_reduction <add>, %4, %cst_9 [0] : vector<8x128xf32> to vector<128xf32>
    %16 = arith.addf %14, %15 : vector<128xf32>
    %c1_10 = arith.constant 1 : index
    %c0_11 = arith.constant 0 : index
    %17 = vector.load %arg5[%c1_10, %c0_11] : memref<8x128xf32, #tpu.memory_space<vmem>>, vector<1x128xf32>
    %18 = vector.shape_cast %17 : vector<1x128xf32> to vector<128xf32>
    %19 = vector.shape_cast %16 : vector<128xf32> to vector<1x128xf32>
    tpu.vector_store %arg5[%c1_10, %c0_11], %19 {strides = array<i32>} : memref<8x128xf32, #tpu.memory_space<vmem>>, vector<1x128xf32>,
    %c2 = arith.constant 2 : index
    %c0_12 = arith.constant 0 : index
    %20 = vector.load %arg5[%c2, %c0_12] : memref<8x128xf32, #tpu.memory_space<vmem>>, vector<1x128xf32>
    %21 = vector.shape_cast %20 : vector<1x128xf32> to vector<128xf32>
    %22 = arith.mulf %3, %4 : vector<8x128xf32>
    %cst_13 = arith.constant dense<0.000000e+00> : vector<128xf32>
    %23 = vector.multi_reduction <add>, %22, %cst_13 [0] : vector<8x128xf32> to vector<128xf32>
    %24 = arith.addf %21, %23 : vector<128xf32>
    %c2_14 = arith.constant 2 : index
    %c0_15 = arith.constant 0 : index
    %25 = vector.load %arg5[%c2_14, %c0_15] : memref<8x128xf32, #tpu.memory_space<vmem>>, vector<1x128xf32>
    %26 = vector.shape_cast %25 : vector<1x128xf32> to vector<128xf32>
    %27 = vector.shape_cast %24 : vector<128xf32> to vector<1x128xf32>
    tpu.vector_store %arg5[%c2_14, %c0_15], %27 {strides = array<i32>} : memref<8x128xf32, #tpu.memory_space<vmem>>, vector<1x128xf32>,
    %c3 = arith.constant 3 : index
    %c0_16 = arith.constant 0 : index
    %28 = vector.load %arg5[%c3, %c0_16] : memref<8x128xf32, #tpu.memory_space<vmem>>, vector<1x128xf32>
    %29 = vector.shape_cast %28 : vector<1x128xf32> to vector<128xf32>
    %30 = arith.mulf %3, %3 : vector<8x128xf32>
    %cst_17 = arith.constant dense<0.000000e+00> : vector<128xf32>
    %31 = vector.multi_reduction <add>, %30, %cst_17 [0] : vector<8x128xf32> to vector<128xf32>
    %32 = arith.addf %29, %31 : vector<128xf32>
    %c3_18 = arith.constant 3 : index
    %c0_19 = arith.constant 0 : index
    %33 = vector.load %arg5[%c3_18, %c0_19] : memref<8x128xf32, #tpu.memory_space<vmem>>, vector<1x128xf32>
    %34 = vector.shape_cast %33 : vector<1x128xf32> to vector<128xf32>
    %35 = vector.shape_cast %32 : vector<128xf32> to vector<1x128xf32>
    tpu.vector_store %arg5[%c3_18, %c0_19], %35 {strides = array<i32>} : memref<8x128xf32, #tpu.memory_space<vmem>>, vector<1x128xf32>,
    %c4 = arith.constant 4 : index
    %c0_20 = arith.constant 0 : index
    %36 = vector.load %arg5[%c4, %c0_20] : memref<8x128xf32, #tpu.memory_space<vmem>>, vector<1x128xf32>
    %37 = vector.shape_cast %36 : vector<1x128xf32> to vector<128xf32>
    %38 = arith.mulf %4, %4 : vector<8x128xf32>
    %cst_21 = arith.constant dense<0.000000e+00> : vector<128xf32>
    %39 = vector.multi_reduction <add>, %38, %cst_21 [0] : vector<8x128xf32> to vector<128xf32>
    %40 = arith.addf %37, %39 : vector<128xf32>
    %c4_22 = arith.constant 4 : index
    %c0_23 = arith.constant 0 : index
    %41 = vector.load %arg5[%c4_22, %c0_23] : memref<8x128xf32, #tpu.memory_space<vmem>>, vector<1x128xf32>
    %42 = vector.shape_cast %41 : vector<1x128xf32> to vector<128xf32>
    %43 = vector.shape_cast %40 : vector<128xf32> to vector<1x128xf32>
    tpu.vector_store %arg5[%c4_22, %c0_23], %43 {strides = array<i32>} : memref<8x128xf32, #tpu.memory_space<vmem>>, vector<1x128xf32>,
    %c5 = arith.constant 5 : index
    %c0_24 = arith.constant 0 : index
    %44 = vector.load %arg5[%c5, %c0_24] : memref<8x128xf32, #tpu.memory_space<vmem>>, vector<1x128xf32>
    %45 = vector.shape_cast %44 : vector<1x128xf32> to vector<128xf32>
    %46 = arith.mulf %5, %5 : vector<8x128xf32>
    %cst_25 = arith.constant dense<0.000000e+00> : vector<128xf32>
    %47 = vector.multi_reduction <add>, %46, %cst_25 [0] : vector<8x128xf32> to vector<128xf32>
    %48 = arith.addf %45, %47 : vector<128xf32>
    %c5_26 = arith.constant 5 : index
    %c0_27 = arith.constant 0 : index
    %49 = vector.load %arg5[%c5_26, %c0_27] : memref<8x128xf32, #tpu.memory_space<vmem>>, vector<1x128xf32>
    %50 = vector.shape_cast %49 : vector<1x128xf32> to vector<128xf32>
    %51 = vector.shape_cast %48 : vector<128xf32> to vector<1x128xf32>
    tpu.vector_store %arg5[%c5_26, %c0_27], %51 {strides = array<i32>} : memref<8x128xf32, #tpu.memory_space<vmem>>, vector<1x128xf32>,
    %c0_i32_28 = arith.constant 0 : i32
    %52 = arith.cmpi eq, %arg0, %c0_i32_28 : i32
    %53 = arith.extui %52 : i1 to i32
    %c0_i32_29 = arith.constant 0 : i32
    %54 = arith.cmpi ne, %53, %c0_i32_29 : i32
    scf.if %54 {
      %c0_30 = arith.constant 0 : index
      %55 = memref.load %arg1[%c0_30] : memref<1xi32, #tpu.memory_space<smem>>
      %56 = arith.sitofp %55 : i32 to f32
      %cst_31 = arith.constant 1.000000e+00 : f32
      %57 = arith.divf %cst_31, %56 : f32
      %c0_32 = arith.constant 0 : index
      %c0_33 = arith.constant 0 : index
      %58 = vector.load %arg5[%c0_32, %c0_33] : memref<8x128xf32, #tpu.memory_space<vmem>>, vector<1x128xf32>
      %59 = vector.shape_cast %58 : vector<1x128xf32> to vector<128xf32>
      %60 = vector.shape_cast %59 : vector<128xf32> to vector<1x128xf32>
      %cst_34 = arith.constant dense<0.000000e+00> : vector<1xf32>
      %61 = vector.multi_reduction <add>, %60, %cst_34 [1] : vector<1x128xf32> to vector<1xf32>
      %62 = vector.shape_cast %61 : vector<1xf32> to vector<1x1xf32>
      %63 = vector.extract %62[0, 0] : f32 from vector<1x1xf32>
      %c1_35 = arith.constant 1 : index
      %c0_36 = arith.constant 0 : index
      %64 = vector.load %arg5[%c1_35, %c0_36] : memref<8x128xf32, #tpu.memory_space<vmem>>, vector<1x128xf32>
      %65 = vector.shape_cast %64 : vector<1x128xf32> to vector<128xf32>
      %66 = vector.shape_cast %65 : vector<128xf32> to vector<1x128xf32>
      %cst_37 = arith.constant dense<0.000000e+00> : vector<1xf32>
      %67 = vector.multi_reduction <add>, %66, %cst_37 [1] : vector<1x128xf32> to vector<1xf32>
      %68 = vector.shape_cast %67 : vector<1xf32> to vector<1x1xf32>
      %69 = vector.extract %68[0, 0] : f32 from vector<1x1xf32>
      %c2_38 = arith.constant 2 : index
      %c0_39 = arith.constant 0 : index
      %70 = vector.load %arg5[%c2_38, %c0_39] : memref<8x128xf32, #tpu.memory_space<vmem>>, vector<1x128xf32>
      %71 = vector.shape_cast %70 : vector<1x128xf32> to vector<128xf32>
      %72 = vector.shape_cast %71 : vector<128xf32> to vector<1x128xf32>
      %cst_40 = arith.constant dense<0.000000e+00> : vector<1xf32>
      %73 = vector.multi_reduction <add>, %72, %cst_40 [1] : vector<1x128xf32> to vector<1xf32>
      %74 = vector.shape_cast %73 : vector<1xf32> to vector<1x1xf32>
      %75 = vector.extract %74[0, 0] : f32 from vector<1x1xf32>
      %c3_41 = arith.constant 3 : index
      %c0_42 = arith.constant 0 : index
      %76 = vector.load %arg5[%c3_41, %c0_42] : memref<8x128xf32, #tpu.memory_space<vmem>>, vector<1x128xf32>
      %77 = vector.shape_cast %76 : vector<1x128xf32> to vector<128xf32>
      %78 = vector.shape_cast %77 : vector<128xf32> to vector<1x128xf32>
      %cst_43 = arith.constant dense<0.000000e+00> : vector<1xf32>
      %79 = vector.multi_reduction <add>, %78, %cst_43 [1] : vector<1x128xf32> to vector<1xf32>
      %80 = vector.shape_cast %79 : vector<1xf32> to vector<1x1xf32>
      %81 = vector.extract %80[0, 0] : f32 from vector<1x1xf32>
      %c4_44 = arith.constant 4 : index
      %c0_45 = arith.constant 0 : index
      %82 = vector.load %arg5[%c4_44, %c0_45] : memref<8x128xf32, #tpu.memory_space<vmem>>, vector<1x128xf32>
      %83 = vector.shape_cast %82 : vector<1x128xf32> to vector<128xf32>
      %84 = vector.shape_cast %83 : vector<128xf32> to vector<1x128xf32>
      %cst_46 = arith.constant dense<0.000000e+00> : vector<1xf32>
      %85 = vector.multi_reduction <add>, %84, %cst_46 [1] : vector<1x128xf32> to vector<1xf32>
      %86 = vector.shape_cast %85 : vector<1xf32> to vector<1x1xf32>
      %87 = vector.extract %86[0, 0] : f32 from vector<1x1xf32>
      %c5_47 = arith.constant 5 : index
      %c0_48 = arith.constant 0 : index
      %88 = vector.load %arg5[%c5_47, %c0_48] : memref<8x128xf32, #tpu.memory_space<vmem>>, vector<1x128xf32>
      %89 = vector.shape_cast %88 : vector<1x128xf32> to vector<128xf32>
      %90 = vector.shape_cast %89 : vector<128xf32> to vector<1x128xf32>
      %cst_49 = arith.constant dense<0.000000e+00> : vector<1xf32>
      %91 = vector.multi_reduction <add>, %90, %cst_49 [1] : vector<1x128xf32> to vector<1xf32>
      %92 = vector.shape_cast %91 : vector<1xf32> to vector<1x1xf32>
      %93 = vector.extract %92[0, 0] : f32 from vector<1x1xf32>
      %94 = arith.mulf %93, %57 : f32
      %95 = arith.mulf %63, %69 : f32
      %96 = arith.mulf %95, %57 : f32
      %97 = arith.subf %75, %96 : f32
      %98 = arith.mulf %63, %63 : f32
      %99 = arith.mulf %98, %57 : f32
      %100 = arith.subf %81, %99 : f32
      %cst_50 = arith.constant 0.000000e+00 : f32
      %101 = arith.maximumf %100, %cst_50 : f32
      %102 = arith.mulf %69, %69 : f32
      %103 = arith.mulf %102, %57 : f32
      %104 = arith.subf %87, %103 : f32
      %cst_51 = arith.constant 0.000000e+00 : f32
      %105 = arith.maximumf %104, %cst_51 : f32
      %106 = math.sqrt %101 : f32
      %107 = math.sqrt %105 : f32
      %108 = arith.mulf %106, %107 : f32
      %cst_52 = arith.constant 9.99999996E-13 : f32
      %109 = arith.addf %108, %cst_52 : f32
      %110 = arith.divf %97, %109 : f32
      %cst_53 = arith.constant 1.000000e+00 : f32
      %111 = arith.subf %cst_53, %110 : f32
      %112 = arith.addf %94, %111 : f32
      %c0_54 = arith.constant 0 : index
      %c0_55 = arith.constant 0 : index
      %113 = memref.load %arg4[%c0_54, %c0_55] : memref<1x1xf32, #tpu.memory_space<smem>>
      memref.store %112, %arg4[%c0_54, %c0_55] : memref<1x1xf32, #tpu.memory_space<smem>>
    } else {
    }
    return
  }
  func.func @transform_0(%arg0: i32, %arg1: memref<1xi32, #tpu.memory_space<smem>>) -> (i32, i32) {
    %c0_i32 = arith.constant 0 : i32
    %c0_i32_0 = arith.constant 0 : i32
    return %arg0, %c0_i32 : i32, i32
  }
  func.func @transform_1(%arg0: i32, %arg1: memref<1xi32, #tpu.memory_space<smem>>) -> (i32, i32) {
    %c0_i32 = arith.constant 0 : i32
    %c0_i32_0 = arith.constant 0 : i32
    return %arg0, %c0_i32 : i32, i32
  }
  func.func @transform_2(%arg0: i32, %arg1: memref<1xi32, #tpu.memory_space<smem>>) -> (i32, i32) {
    %c0_i32 = arith.constant 0 : i32
    %c0_i32_0 = arith.constant 0 : i32
    %c0_i32_1 = arith.constant 0 : i32
    return %c0_i32, %c0_i32_0 : i32, i32
  }
}

</mosaic_0001>

<llo_original>
// kernel: multi_loss.1
$region0: #{multi_loss.1}
  #allocation0 [shape = 'u32[]', space=smem, size = 0x4, offset = 0x4, fixed_abs, tag = 'smem constant byte address 0x4 - core index']
  #allocation1 [shape = 'u32[144,128]{1,0:T(1,128)}', space=vmem, size = 0x12000, scoped, tag = 'internal scratch']
  #allocation2 [shape = 'f32[8,128]{1,0:T(8,128)}', space=vmem, size = 0x1000, scoped, tag = 'scratch operand']
  #allocation3 [shape = 's32[1]{0}', space=sflag, size = 0x4, scoped, tag = 'scoped memory for multi_loss.1']
  #allocation4 [shape = 's32[1]{0:T(128)S(6)}', space=smem, size = 0x200, scoped, tag = 'prefetched SMEM operand 0']
  %s0 = inlined_call_operand.<no memory space> [shape: s32[1], index: 0, kind: input, shape index: {}]
  %s1 = inlined_call_operand.vmem [shape: f32[8,128], index: 1, kind: input, shape index: {}]
  %s2 = inlined_call_operand.vmem [shape: f32[8,128], index: 2, kind: input, shape index: {}]
  %s3 = inlined_call_operand.hbm [shape: f32[1,1], index: 3, kind: output, shape index: {}]
  %s4 = sld [smem:[#allocation0]]
  $region26: #{multi_loss.1} parent=0
    _
  %s6 = ssub.s32 1, %s4
  %s7 = scalar_select 0, %s6, %s4
  %8 = sst [smem:[#allocation4]] %s0
  $region1: #{multi_loss.1} parent=0
    #allocation5 [shape = 'u8[512]{0}', space=smem, size = 0x200, scoped, tag = 'output window, operand 0, single buffered']
    #allocation6 [shape = 's32[1]{0}', space=sflag, size = 0x4, scoped, tag = 'scoped memory for multi_loss.1']
    %9 = vsyncpa [#allocation6], 0
    // Predicated region
    $region2: #{multi_loss.1} parent=1 // pred_check
      _
    $region3: #{multi_loss.1} parent=1 // pred_check_branch
      %11 = sbr.rel (0) target = $region5
    $region4: #{multi_loss.1} parent=1 // pred_region
      _
    $region5: #{multi_loss.1} parent=1 // pred_fallthru
      _
    // Predicated region
    $region6: #{multi_loss.1} parent=1 // pred_check
      _
    $region7: #{multi_loss.1} parent=1 // pred_check_branch
      %13 = sbr.rel (0) target = $region9
    $region8: #{multi_loss.1} parent=1 // pred_region
      _
    $region9: #{multi_loss.1} parent=1 // pred_fallthru
      _
    %p14 = scmp.eq.s32.totalorder 0, 0
    // Predicated region
    $region10: #{multi_loss.1} parent=1 // pred_check
      %p15 = pneg %p14
    $region11: #{multi_loss.1} parent=1 // pred_check_branch
      %17 = sbr.rel (%p15) target = $region13
    $region12: #{multi_loss.1} parent=1 // pred_region
      %18 = vst [vmem:[#allocation2] sm:$0xff] 0.0
    $region13: #{multi_loss.1} parent=1 // pred_fallthru
      _
    %v19 = vld [vmem:[%s1] sm:$0xff]
    %v20 = vld [vmem:[%s2] sm:$0xff]
    %v21 = vsub.f32 %v19, %v20
    %v22 = vld [vmem:[#allocation2] sm:$0x1]
    %v23 = vrot.slane %v19, 4
    %v24 = vadd.f32 %v19, %v23
    %v25 = vrot.slane %v24, 2
    %v26 = vadd.f32 %v24, %v25
    %v27 = vrot.slane %v26, 1
    %v28 = vadd.f32 %v26, %v27
    %v29 = vadd.f32 %v22, %v28
    %30 = vst [vmem:[#allocation2] sm:$0x1] %v29
    %v31 = vld [vmem:[#allocation2 + $0x1] sm:$0x1]
    %v32 = vrot.slane %v20, 4
    %v33 = vadd.f32 %v20, %v32
    %v34 = vrot.slane %v33, 2
    %v35 = vadd.f32 %v33, %v34
    %v36 = vrot.slane %v35, 1
    %v37 = vadd.f32 %v35, %v36
    %v38 = vadd.f32 %v31, %v37
    %39 = vst [vmem:[#allocation2 + $0x1] sm:$0x1] %v38
    %v40 = vld [vmem:[#allocation2 + $0x2] sm:$0x1]
    %v41 = vmul.f32 %v19, %v20
    %v42 = vrot.slane %v41, 4
    %v43 = vadd.f32 %v41, %v42
    %v44 = vrot.slane %v43, 2
    %v45 = vadd.f32 %v43, %v44
    %v46 = vrot.slane %v45, 1
    %v47 = vadd.f32 %v45, %v46
    %v48 = vadd.f32 %v40, %v47
    %49 = vst [vmem:[#allocation2 + $0x2] sm:$0x1] %v48
    %v50 = vld [vmem:[#allocation2 + $0x3] sm:$0x1]
    %v51 = vmul.f32 %v19, %v19
    %v52 = vrot.slane %v51, 4
    %v53 = vadd.f32 %v51, %v52
    %v54 = vrot.slane %v53, 2
    %v55 = vadd.f32 %v53, %v54
    %v56 = vrot.slane %v55, 1
    %v57 = vadd.f32 %v55, %v56
    %v58 = vadd.f32 %v50, %v57
    %59 = vst [vmem:[#allocation2 + $0x3] sm:$0x1] %v58
    %v60 = vld [vmem:[#allocation2 + $0x4] sm:$0x1]
    %v61 = vmul.f32 %v20, %v20
    %v62 = vrot.slane %v61, 4
    %v63 = vadd.f32 %v61, %v62
    %v64 = vrot.slane %v63, 2
    %v65 = vadd.f32 %v63, %v64
    %v66 = vrot.slane %v65, 1
    %v67 = vadd.f32 %v65, %v66
    %v68 = vadd.f32 %v60, %v67
    %69 = vst [vmem:[#allocation2 + $0x4] sm:$0x1] %v68
    %v70 = vld [vmem:[#allocation2 + $0x5] sm:$0x1]
    %v71 = vmul.f32 %v21, %v21
    %v72 = vrot.slane %v71, 4
    %v73 = vadd.f32 %v71, %v72
    %v74 = vrot.slane %v73, 2
    %v75 = vadd.f32 %v73, %v74
    %v76 = vrot.slane %v75, 1
    %v77 = vadd.f32 %v75, %v76
    %v78 = vadd.f32 %v70, %v77
    %79 = vst [vmem:[#allocation2 + $0x5] sm:$0x1] %v78
    // Predicated region
    $region14: #{multi_loss.1} parent=1 // pred_check
      %p80 = pneg %p14
    $region15: #{multi_loss.1} parent=1 // pred_check_branch
      %82 = sbr.rel (%p80) target = $region17
    $region16: #{multi_loss.1} parent=1 // pred_region
      %s83 = sld [smem:[#allocation4]]
      %s84 = scvt.s32.f32 %s83
      %v85 = vstv %s84
      %v86 = vrcp.pop %v85
      %s87 = vtos %v86
      %v88 = vld [vmem:[#allocation2] sm:$0x1]
      %vm89 = vcmask 1040384
      %v90 = vsel %vm89, %v88, 0.0
      %91 = vadd.xlane.f32.xlu0 %v90
      %v92 = vpop.xlane.xlu0 %91
      %s93 = vtos %v92
      %v94 = vld [vmem:[#allocation2 + $0x1] sm:$0x1]
      %v95 = vsel %vm89, %v94, 0.0
      %96 = vadd.xlane.f32.xlu0 %v95
      %v97 = vpop.xlane.xlu0 %96
      %s98 = vtos %v97
      %v99 = vld [vmem:[#allocation2 + $0x2] sm:$0x1]
      %v100 = vsel %vm89, %v99, 0.0
      %101 = vadd.xlane.f32.xlu0 %v100
      %v102 = vpop.xlane.xlu0 %101
      %s103 = vtos %v102
      %v104 = vld [vmem:[#allocation2 + $0x3] sm:$0x1]
      %v105 = vsel %vm89, %v104, 0.0
      %106 = vadd.xlane.f32.xlu0 %v105
      %v107 = vpop.xlane.xlu0 %106
      %s108 = vtos %v107
      %v109 = vld [vmem:[#allocation2 + $0x4] sm:$0x1]
      %v110 = vsel %vm89, %v109, 0.0
      %111 = vadd.xlane.f32.xlu0 %v110
      %v112 = vpop.xlane.xlu0 %111
      %s113 = vtos %v112
      %v114 = vld [vmem:[#allocation2 + $0x5] sm:$0x1]
      %v115 = vsel %vm89, %v114, 0.0
      %116 = vadd.xlane.f32.xlu0 %v115
      %v117 = vpop.xlane.xlu0 %116
      %s118 = vtos %v117
      %s119 = smul.f32 %s118, %s87
      %s120 = smul.f32 %s93, %s98
      %s121 = smul.f32 %s120, %s87
      %s122 = ssub.f32 %s103, %s121
      %s123 = smul.f32 %s93, %s93
      %s124 = smul.f32 %s123, %s87
      %s125 = ssub.f32 %s108, %s124
      %s126 = smax.f32 %s125, 0.0
      %s127 = smul.f32 %s98, %s98
      %s128 = smul.f32 %s127, %s87
      %s129 = ssub.f32 %s113, %s128
      %s130 = smax.f32 %s129, 0.0
      %v131 = vstv %s126
      %v132 = vrsqrt.pop %v131
      %v133 = vmul.f32 %v131, %v132
      %vm134 = vcmp.eq.f32.partialorder %v131, inf
      %v135 = vsel %vm134, %v131, %v133
      %vm136 = vcmp.eq.f32.partialorder %v131, 0.0
      %v137 = vand.u32 %v131, 2147483648
      %v138 = vsel %vm136, %v137, %v135
      %s139 = vtos %v138
      %v140 = vstv %s130
      %v141 = vrsqrt.pop %v140
      %v142 = vmul.f32 %v140, %v141
      %vm143 = vcmp.eq.f32.partialorder %v140, inf
      %v144 = vsel %vm143, %v140, %v142
      %vm145 = vcmp.eq.f32.partialorder %v140, 0.0
      %v146 = vand.u32 %v140, 2147483648
      %v147 = vsel %vm145, %v146, %v144
      %s148 = vtos %v147
      %s149 = smul.f32 %s139, %s148
      %s150 = sadd.f32 %s149, 1e-12
      %v151 = vstv %s150
      %v152 = vrcp.pop %v151
      %s153 = vtos %v152
      %s154 = smul.f32 %s122, %s153
      %s155 = ssub.f32 1.0, %s154
      %s156 = sadd.f32 %s119, %s155
      %s157 = scalar_lea.smem [#allocation5], 0
      %158 = sst [smem:[%s157]] %s156
    $region17: #{multi_loss.1} parent=1 // pred_fallthru
      _
    // Predicated region
    $region18: #{multi_loss.1} parent=1 // pred_check
      _
    $region19: #{multi_loss.1} parent=1 // pred_check_branch
      %160 = sbr.rel (0) target = $region21
    $region20: #{multi_loss.1} parent=1 // pred_region
      %s162 = ssub.s32 16, 16
      %163 = vsyncadd [#allocation6], %s162
      %166 = dma.smem_to_hbm [#allocation5], 16, %s3, [#allocation6]
    $region21: #{multi_loss.1} parent=1 // pred_fallthru
      _
    // Predicated region
    $region22: #{multi_loss.1} parent=1 // pred_check
      _
    $region23: #{multi_loss.1} parent=1 // pred_check_branch
      %168 = sbr.rel (0) target = $region25
    $region24: #{multi_loss.1} parent=1 // pred_region
      %169 = dma.done [#allocation6], 16
    $region25: #{multi_loss.1} parent=1 // pred_fallthru
      _
    %170 = sfence
    %171 = vsyncpa [#allocation6], 1

</llo_original>
